<compile_context>
chip_gen: v7x
topology: tpu7x:2x2x1
jax: 0.10.0
libtpu: 0.0.40
codegen_flags: <defaults>
</compile_context>

<pallas_src>
import math
from functools import partial

import numpy as np
import jax
import jax.numpy as jnp
from jax.experimental import pallas as pl
from jax.experimental.pallas import tpu as pltpu

FEAT_DIM = 32
EMBED_DIM = 16
NUM_RELATIONS = 5
NUM_NODES = 64
BATCH = 8
LANE = 128                 # vreg lane width
OUT_W = 2 * LANE           # output slab: [0:128) relu-combine, [128:130) scores


# --------------------------- fused Pallas kernel -----------------------------

def _inter_agg5_kernel(adj_ref, fu_ref, fs_ref, w_ref, b_ref, out_ref):
    """One kernel for the whole post-gather compute of InterAgg5.forward.

    adj_ref : (5*n_pad, U_pad)   row-normalized adjacency stack (5 relations)
    fu_ref  : (U_pad, feat_dim)  gathered unique-node features
    fs_ref  : (n_pad, feat_dim)  gathered center-node (self) features
    w_ref   : (6*feat_dim, 256)  [folded combine weight | padded label_clf^T]
    b_ref   : (1, 256)           zeros | label_clf bias in lanes 128..129
    out_ref : (n_pad, 256)       relu(combine) in lanes [0:128),
                                 label-aware scores in lanes [128:130)
    """
    fd = fs_ref.shape[1]
    n_pad = fs_ref.shape[0]

    # All 5 neighbor means at once — a single MXU dot over the normalized
    # adjacency stack.
    agg = jnp.dot(adj_ref[...], fu_ref[...], preferred_element_type=jnp.float32)

    # Per-block accumulated dots, held in a vreg accumulator (no VMEM staging).
    # Block 0 (self) also carries the classifier columns (lanes 128..129);
    # the relation blocks are zero in those lanes, so accumulating is exact.
    acc = jnp.dot(fs_ref[...], w_ref[0:fd, :], preferred_element_type=jnp.float32)
    for r in range(NUM_RELATIONS):
        acc = acc + jnp.dot(agg[r * n_pad:(r + 1) * n_pad, :],
                            w_ref[(r + 1) * fd:(r + 2) * fd, :],
                            preferred_element_type=jnp.float32)

    z = acc + b_ref[...]                          # bias nonzero only in score lanes
    out_ref[:, :LANE] = jnp.maximum(z[:, :LANE], 0.0)   # combined (relu), lane-aligned
    out_ref[:, LANE:] = z[:, LANE:]                       # label-aware scores


def _fused_forward_call(adj, f_unique, f_self, w_big, b_big):
    n_pad = f_self.shape[0]
    return pl.pallas_call(
        _inter_agg5_kernel,
        out_shape=jax.ShapeDtypeStruct((n_pad, OUT_W), jnp.float32),
        in_specs=[pl.BlockSpec(memory_space=pltpu.MemorySpace.VMEM)] * 5,
        out_specs=pl.BlockSpec(memory_space=pltpu.MemorySpace.VMEM),
        # TODO(synk): if batch/graph size grows, add a grid over node blocks
        # with dimension_semantics=("parallel",) to use both v7x TensorCores,
        # and tile the U (reduction) axis as a trailing "arbitrary" dim.
    )(adj, f_unique, f_self, w_big, b_big)


@partial(jax.jit, static_argnames=("n",))
def _device_forward(features, unique_idx, self_idx, adj, w_big, b_big, *, n):
    f_unique = features[unique_idx]                 # XLA gather (unique nodes)
    f_self = features[self_idx]                     # XLA gather (center nodes)
    out = _fused_forward_call(adj, f_unique, f_self, w_big, b_big)
    combined = out[:n, :EMBED_DIM].T                # the .t() in the reference
    center_scores = out[:n, LANE:LANE + 2]
    return combined, center_scores


# --------------------------- parameter init ----------------------------------

def xavier_uniform(key, shape):
    fan_in, fan_out = shape
    bound = math.sqrt(6.0 / (fan_in + fan_out))
    return jax.random.uniform(key, shape, jnp.float32, -bound, bound)


def init_params(key):
    k = jax.random.split(key, 3 + NUM_RELATIONS)
    # nn.Parameter((embed_dim * 5 + feat_dim, embed_dim)), xavier_uniform_
    weight = xavier_uniform(k[0], (FEAT_DIM + NUM_RELATIONS * EMBED_DIM,
                                   EMBED_DIM))
    # nn.Linear(feat_dim, 2)
    clf_w = xavier_uniform(k[1], (2, FEAT_DIM))
    clf_b = jax.random.uniform(k[2], (2,), jnp.float32, -0.1, 0.1)
    # deterministic projections standing in for the external intra-aggregators
    intra_w = [xavier_uniform(k[3 + r], (FEAT_DIM, EMBED_DIM))
               for r in range(NUM_RELATIONS)]

    # One-time weight folding:  cat([self, mean_r @ intra_w_r], 1) @ weight
    #   == [self, mean_1..mean_5] @ vstack(weight[:fd],
    #                                      intra_w_r @ weight[fd+r*ed:fd+(r+1)*ed])
    blocks = [weight[:FEAT_DIM, :]]
    for r in range(NUM_RELATIONS):
        wr = weight[FEAT_DIM + r * EMBED_DIM: FEAT_DIM + (r + 1) * EMBED_DIM, :]
        blocks.append(intra_w[r] @ wr)
    w_fold = jnp.concatenate(blocks, axis=0)         # (6*feat_dim, embed_dim)

    # Combine + classifier merged into one lane-dense (6*feat_dim, 256) RHS:
    #   lanes [0:EMBED_DIM)      : folded combine weight (rest of [0:128) zero)
    #   lanes [128:130), rows<fd : label_clf weight^T    (rest zero)
    w_big = jnp.zeros((6 * FEAT_DIM, OUT_W), jnp.float32)
    w_big = w_big.at[:, :EMBED_DIM].set(w_fold)
    w_big = w_big.at[:FEAT_DIM, LANE:LANE + 2].set(clf_w.T)
    b_big = jnp.zeros((1, OUT_W), jnp.float32).at[0, LANE:LANE + 2].set(clf_b)

    return {"weight": weight, "clf_w": clf_w, "clf_b": clf_b,
            "intra_w": intra_w, "w_fold": w_fold,
            "w_big": w_big, "b_big": b_big}


# --------------------------- forward (InterAgg5) ------------------------------

def inter_agg5_forward(params, features, adj_lists, nodes, labels,
                       train_pos, train_flag=True):
    # ---- host-side graph bookkeeping (python sets / numpy only) -------------
    to_neighs = [[set(adj_list[int(node)]) for node in nodes]
                 for adj_list in adj_lists]
    unique_nodes = set.union(
        set.union(*to_neighs[0]),
        set.union(*to_neighs[1]),
        set.union(*to_neighs[2], set(nodes)),
        set.union(*to_neighs[3], set(nodes)),
        set.union(*to_neighs[4], set(nodes)),
    )
    unique_nodes = list(unique_nodes)
    id_mapping = {nid: i for i, nid in enumerate(unique_nodes)}

    n = len(nodes)
    n_pad = max(8, -(-n // 8) * 8)
    U = len(unique_nodes)
    U_pad = max(8, -(-U // 8) * 8)

    # Gather indices (padded with node 0; padded adjacency columns are zero and
    # padded self rows are sliced off after the kernel).
    unique_idx = np.zeros((U_pad,), np.int32)
    unique_idx[:U] = np.asarray(unique_nodes, np.int32)
    self_idx = np.zeros((n_pad,), np.int32)
    self_idx[:n] = np.asarray([int(v) for v in nodes], np.int32)

    # Row-normalized adjacency stack (5 relations), built as a single fancy
    # assignment.  Each (row, col) appears once because neighbors are sets.
    # TODO(synk): for large graphs, pass padded neighbor indices + 1/deg via
    # PrefetchScalarGridSpec and do the gather/mean in-kernel so only int32
    # indices cross the host boundary.
    rows, cols, vals = [], [], []
    for rel in range(NUM_RELATIONS):
        base = rel * n_pad
        for i in range(n):
            neigh = to_neighs[rel][i]
            inv_deg = 1.0 / max(len(neigh), 1)       # guards empty sets
            for nb in neigh:
                rows.append(base + i)
                cols.append(id_mapping[nb])
                vals.append(inv_deg)
    adj = np.zeros((NUM_RELATIONS * n_pad, U_pad), np.float32)
    if rows:
        adj[np.asarray(rows, np.int64), np.asarray(cols, np.int64)] = \
            np.asarray(vals, np.float32)

    # TODO(synk): intra_agg1..5 are external submodules not defined in this
    # file; they are stood in by "mean of neighbors -> linear projection",
    # folded into params["w_big"].  The batch/pos/relation label scores that
    # only feed those submodules are therefore not materialized (center_scores
    # is computed exactly, fused in the kernel).  `labels`, `train_pos`,
    # `train_flag` are consumed only by those submodules in the reference.
    combined, center_scores = _device_forward(
        features, jnp.asarray(unique_idx), jnp.asarray(self_idx),
        jnp.asarray(adj), params["w_big"], params["b_big"], n=n)
    return combined, center_scores


# --------------------------- demo / smoke test --------------------------------

if __name__ == "__main__":
    key = jax.random.PRNGKey(0)
    k_feat, k_param = jax.random.split(key)

    # node feature table (stand-in for the nn.Embedding `features` lookup)
    features = jax.random.normal(k_feat, (NUM_NODES, FEAT_DIM), jnp.float32)
    params = init_params(k_param)

    # deterministic 5-relation adjacency lists, 3 neighbors per node
    rng = np.random.RandomState(0)
    adj_lists = []
    for _ in range(NUM_RELATIONS):
        adj = {v: [int(x) for x in rng.choice(NUM_NODES, size=3, replace=False)]
               for v in range(NUM_NODES)}
        adj_lists.append(adj)

    nodes = list(range(BATCH))
    labels = [0, 1] * (BATCH // 2)
    train_pos = [1, 3, 5]

    combined, center_scores = inter_agg5_forward(
        params, features, adj_lists, nodes, labels, train_pos, train_flag=True)
    combined = jax.block_until_ready(combined)
    center_scores = jax.block_until_ready(center_scores)

    # ---- plain numpy reference (same math, no Pallas) -------------------------
    feats_np = np.asarray(features)
    self_np = feats_np[np.asarray(nodes)]
    ref_center = self_np @ np.asarray(params["clf_w"]).T + np.asarray(params["clf_b"])
    cat_blocks = [self_np]
    for rel in range(NUM_RELATIONS):
        means = np.stack(
            [feats_np[sorted(set(adj_lists[rel][int(v)]))].mean(axis=0)
             for v in nodes], axis=0)
        cat_blocks.append(means @ np.asarray(params["intra_w"][rel]))
    ref_combined = np.maximum(
        np.concatenate(cat_blocks, axis=1) @ np.asarray(params["weight"]), 0.0).T

    assert combined.shape == (EMBED_DIM, BATCH)
    assert center_scores.shape == (BATCH, 2)
    assert bool(jnp.all(combined >= 0.0))
    assert bool(jnp.all(jnp.isfinite(combined)))
    assert bool(jnp.all(jnp.isfinite(center_scores)))
    np.testing.assert_allclose(np.asarray(combined), ref_combined,
                               rtol=1e-3, atol=1e-3)
    np.testing.assert_allclose(np.asarray(center_scores), ref_center,
                               rtol=1e-3, atol=1e-3)

    print("KERNEL_OK")
</pallas_src>

<mosaic_0001>
module attributes {stable_mosaic.version = 11 : i64} {
  func.func @_inter_agg5_kernel(%arg0: memref<40x56xf32, #tpu.memory_space<vmem>>, %arg1: memref<56x32xf32, #tpu.memory_space<vmem>>, %arg2: memref<8x32xf32, #tpu.memory_space<vmem>>, %arg3: memref<192x256xf32, #tpu.memory_space<vmem>>, %arg4: memref<1x256xf32, #tpu.memory_space<vmem>>, %arg5: memref<8x256xf32, #tpu.memory_space<vmem>>) attributes {dimension_semantics = [], scalar_prefetch = 0 : i64, scratch_operands = 0 : i64, tpu.core_type = #tpu.core_type<tc>} {
    %c0 = arith.constant 0 : index
    %c0_0 = arith.constant 0 : index
    %0 = vector.load %arg0[%c0, %c0_0] : memref<40x56xf32, #tpu.memory_space<vmem>>, vector<40x56xf32>
    %c0_1 = arith.constant 0 : index
    %c0_2 = arith.constant 0 : index
    %1 = vector.load %arg1[%c0_1, %c0_2] : memref<56x32xf32, #tpu.memory_space<vmem>>, vector<56x32xf32>
    %cst = arith.constant dense<0.000000e+00> : vector<40x32xf32>
    %2 = tpu.matmul %0, %1, %cst {dimension_numbers = #tpu.dot_dimension_numbers<[1], [0], [0], [1], [0, 0, 1, 1], [], []>} : vector<40x56xf32>, vector<56x32xf32>, vector<40x32xf32> -> vector<40x32xf32>
    %c0_3 = arith.constant 0 : index
    %c0_4 = arith.constant 0 : index
    %3 = vector.load %arg2[%c0_3, %c0_4] : memref<8x32xf32, #tpu.memory_space<vmem>>, vector<8x32xf32>
    %c0_5 = arith.constant 0 : index
    %c0_6 = arith.constant 0 : index
    %4 = vector.load %arg3[%c0_5, %c0_6] : memref<192x256xf32, #tpu.memory_space<vmem>>, vector<32x256xf32>
    %cst_7 = arith.constant dense<0.000000e+00> : vector<8x256xf32>
    %5 = tpu.matmul %3, %4, %cst_7 {dimension_numbers = #tpu.dot_dimension_numbers<[1], [0], [0], [1], [0, 0, 1, 1], [], []>} : vector<8x32xf32>, vector<32x256xf32>, vector<8x256xf32> -> vector<8x256xf32>
    %6 = vector.extract_strided_slice %2 {offsets = [0, 0], sizes = [8, 32], strides = [1, 1]} : vector<40x32xf32> to vector<8x32xf32>
    %c32 = arith.constant 32 : index
    %c0_8 = arith.constant 0 : index
    %7 = vector.load %arg3[%c32, %c0_8] : memref<192x256xf32, #tpu.memory_space<vmem>>, vector<32x256xf32>
    %cst_9 = arith.constant dense<0.000000e+00> : vector<8x256xf32>
    %8 = tpu.matmul %6, %7, %cst_9 {dimension_numbers = #tpu.dot_dimension_numbers<[1], [0], [0], [1], [0, 0, 1, 1], [], []>} : vector<8x32xf32>, vector<32x256xf32>, vector<8x256xf32> -> vector<8x256xf32>
    %9 = arith.addf %5, %8 : vector<8x256xf32>
    %10 = vector.extract_strided_slice %2 {offsets = [8, 0], sizes = [8, 32], strides = [1, 1]} : vector<40x32xf32> to vector<8x32xf32>
    %c64 = arith.constant 64 : index
    %c0_10 = arith.constant 0 : index
    %11 = vector.load %arg3[%c64, %c0_10] : memref<192x256xf32, #tpu.memory_space<vmem>>, vector<32x256xf32>
    %cst_11 = arith.constant dense<0.000000e+00> : vector<8x256xf32>
    %12 = tpu.matmul %10, %11, %cst_11 {dimension_numbers = #tpu.dot_dimension_numbers<[1], [0], [0], [1], [0, 0, 1, 1], [], []>} : vector<8x32xf32>, vector<32x256xf32>, vector<8x256xf32> -> vector<8x256xf32>
    %13 = arith.addf %9, %12 : vector<8x256xf32>
    %14 = vector.extract_strided_slice %2 {offsets = [16, 0], sizes = [8, 32], strides = [1, 1]} : vector<40x32xf32> to vector<8x32xf32>
    %c96 = arith.constant 96 : index
    %c0_12 = arith.constant 0 : index
    %15 = vector.load %arg3[%c96, %c0_12] : memref<192x256xf32, #tpu.memory_space<vmem>>, vector<32x256xf32>
    %cst_13 = arith.constant dense<0.000000e+00> : vector<8x256xf32>
    %16 = tpu.matmul %14, %15, %cst_13 {dimension_numbers = #tpu.dot_dimension_numbers<[1], [0], [0], [1], [0, 0, 1, 1], [], []>} : vector<8x32xf32>, vector<32x256xf32>, vector<8x256xf32> -> vector<8x256xf32>
    %17 = arith.addf %13, %16 : vector<8x256xf32>
    %18 = vector.extract_strided_slice %2 {offsets = [24, 0], sizes = [8, 32], strides = [1, 1]} : vector<40x32xf32> to vector<8x32xf32>
    %c128 = arith.constant 128 : index
    %c0_14 = arith.constant 0 : index
    %19 = vector.load %arg3[%c128, %c0_14] : memref<192x256xf32, #tpu.memory_space<vmem>>, vector<32x256xf32>
    %cst_15 = arith.constant dense<0.000000e+00> : vector<8x256xf32>
    %20 = tpu.matmul %18, %19, %cst_15 {dimension_numbers = #tpu.dot_dimension_numbers<[1], [0], [0], [1], [0, 0, 1, 1], [], []>} : vector<8x32xf32>, vector<32x256xf32>, vector<8x256xf32> -> vector<8x256xf32>
    %21 = arith.addf %17, %20 : vector<8x256xf32>
    %22 = vector.extract_strided_slice %2 {offsets = [32, 0], sizes = [8, 32], strides = [1, 1]} : vector<40x32xf32> to vector<8x32xf32>
    %c160 = arith.constant 160 : index
    %c0_16 = arith.constant 0 : index
    %23 = vector.load %arg3[%c160, %c0_16] : memref<192x256xf32, #tpu.memory_space<vmem>>, vector<32x256xf32>
    %cst_17 = arith.constant dense<0.000000e+00> : vector<8x256xf32>
    %24 = tpu.matmul %22, %23, %cst_17 {dimension_numbers = #tpu.dot_dimension_numbers<[1], [0], [0], [1], [0, 0, 1, 1], [], []>} : vector<8x32xf32>, vector<32x256xf32>, vector<8x256xf32> -> vector<8x256xf32>
    %25 = arith.addf %21, %24 : vector<8x256xf32>
    %c0_18 = arith.constant 0 : index
    %c0_19 = arith.constant 0 : index
    %26 = vector.load %arg4[%c0_18, %c0_19] : memref<1x256xf32, #tpu.memory_space<vmem>>, vector<1x256xf32>
    %27 = vector.broadcast %26 : vector<1x256xf32> to vector<8x256xf32>
    %28 = arith.addf %25, %27 : vector<8x256xf32>
    %29 = vector.extract_strided_slice %28 {offsets = [0, 0], sizes = [8, 128], strides = [1, 1]} : vector<8x256xf32> to vector<8x128xf32>
    %cst_20 = arith.constant 0.000000e+00 : f32
    %30 = vector.broadcast %cst_20 : f32 to vector<8x128xf32>
    %31 = arith.maximumf %29, %30 : vector<8x128xf32>
    %c0_21 = arith.constant 0 : index
    %c0_22 = arith.constant 0 : index
    %32 = vector.load %arg5[%c0_21, %c0_22] : memref<8x256xf32, #tpu.memory_space<vmem>>, vector<8x128xf32>
    tpu.vector_store %arg5[%c0_21, %c0_22], %31 {strides = array<i32>} : memref<8x256xf32, #tpu.memory_space<vmem>>, vector<8x128xf32>,
    %33 = vector.extract_strided_slice %28 {offsets = [0, 128], sizes = [8, 128], strides = [1, 1]} : vector<8x256xf32> to vector<8x128xf32>
    %c0_23 = arith.constant 0 : index
    %c128_24 = arith.constant 128 : index
    %34 = vector.load %arg5[%c0_23, %c128_24] : memref<8x256xf32, #tpu.memory_space<vmem>>, vector<8x128xf32>
    tpu.vector_store %arg5[%c0_23, %c128_24], %33 {strides = array<i32>} : memref<8x256xf32, #tpu.memory_space<vmem>>, vector<8x128xf32>,
    return
  }
}

</mosaic_0001>

<llo_original>
// kernel: _device_forward.1
$region0: #{_device_forward.1}
  #allocation0 [shape = 'u32[]', space=smem, size = 0x4, offset = 0x4, fixed_abs, tag = 'smem constant byte address 0x4 - core index']
  #allocation1 [shape = 'u32[144,128]{1,0:T(1,128)}', space=vmem, size = 0x12000, scoped, tag = 'internal scratch']
  %s0 = inlined_call_operand.vmem [shape: f32[40,56], index: 0, kind: input, shape index: {}]
  %s1 = inlined_call_operand.vmem [shape: f32[56,32], index: 1, kind: input, shape index: {}]
  %s2 = inlined_call_operand.vmem [shape: f32[8,32], index: 2, kind: input, shape index: {}]
  %s3 = inlined_call_operand.vmem [shape: f32[192,256], index: 3, kind: input, shape index: {}]
  %s4 = inlined_call_operand.vmem [shape: f32[1,256], index: 4, kind: input, shape index: {}]
  %s5 = inlined_call_operand.vmem [shape: f32[8,256], index: 5, kind: output, shape index: {}]
  %s6 = sld [smem:[#allocation0]]
  $region30: #{_device_forward.1} parent=0
    _
  %s8 = ssub.s32 1, %s6
  %s9 = scalar_select 0, %s8, %s6
  // Predicated region
  $region2: #{_device_forward.1} parent=0 // pred_check
    _
  $region3: #{_device_forward.1} parent=0 // pred_check_branch
    %11 = sbr.rel (0) target = $region5
  $region4: #{_device_forward.1} parent=0 // pred_region
    _
  $region5: #{_device_forward.1} parent=0 // pred_fallthru
    _
  // Predicated region
  $region6: #{_device_forward.1} parent=0 // pred_check
    _
  $region7: #{_device_forward.1} parent=0 // pred_check_branch
    %13 = sbr.rel (0) target = $region9
  $region8: #{_device_forward.1} parent=0 // pred_region
    _
  $region9: #{_device_forward.1} parent=0 // pred_fallthru
    _
  // Predicated region
  $region10: #{_device_forward.1} parent=0 // pred_check
    _
  $region11: #{_device_forward.1} parent=0 // pred_check_branch
    %15 = sbr.rel (0) target = $region13
  $region12: #{_device_forward.1} parent=0 // pred_region
    _
  $region13: #{_device_forward.1} parent=0 // pred_fallthru
    _
  // Predicated region
  $region14: #{_device_forward.1} parent=0 // pred_check
    _
  $region15: #{_device_forward.1} parent=0 // pred_check_branch
    %17 = sbr.rel (0) target = $region17
  $region16: #{_device_forward.1} parent=0 // pred_region
    _
  $region17: #{_device_forward.1} parent=0 // pred_fallthru
    _
  // Predicated region
  $region18: #{_device_forward.1} parent=0 // pred_check
    _
  $region19: #{_device_forward.1} parent=0 // pred_check_branch
    %19 = sbr.rel (0) target = $region21
  $region20: #{_device_forward.1} parent=0 // pred_region
    _
  $region21: #{_device_forward.1} parent=0 // pred_fallthru
    _
  %v20 = vld [vmem:[%s0] sm:$0xff]
  %v21 = vld [vmem:[%s0 + $0x8] sm:$0xff]
  %v22 = vld [vmem:[%s0 + $0x10] sm:$0xff]
  %v23 = vld [vmem:[%s0 + $0x18] sm:$0xff]
  %v24 = vld [vmem:[%s0 + $0x20] sm:$0xff]
  %v25 = vld [vmem:[%s1] sm:$0xff]
  %v26 = vld [vmem:[%s1 + $0x8] sm:$0xff]
  %v27 = vld [vmem:[%s1 + $0x10] sm:$0xff]
  %v28 = vld [vmem:[%s1 + $0x18] sm:$0xff]
  %v29 = vld [vmem:[%s1 + $0x20] sm:$0xff]
  %v30 = vld [vmem:[%s1 + $0x28] sm:$0xff]
  %v31 = vld [vmem:[%s1 + $0x30] sm:$0xff]
  %vm32 = vcmask 457728
  %v34 = vsel %vm32, %v20, 0
  %v37 = vsel %vm32, %v21, 0
  %v40 = vsel %vm32, %v22, 0
  %v43 = vsel %vm32, %v23, 0
  %v46 = vsel %vm32, %v24, 0
  %48 = vmatprep.subr.mxu0 0.0
  %49 = vmatpush1.msra.mxu0 %v25
  %50 = vmatprep.subr.mxu0 0.0
  %51 = vmatpush1.msra.mxu0 %v26
  %52 = vmatprep.subr.mxu0 0.0
  %53 = vmatpush1.msra.mxu0 %v27
  %54 = vmatprep.subr.mxu0 0.0
  %55 = vmatpush1.msra.mxu0 %v28
  %56 = vmatprep.subr.mxu0 0.0
  %57 = vmatpush1.msra.mxu0 %v29
  %58 = vmatprep.subr.mxu0 0.0
  %59 = vmatpush1.msra.mxu0 %v30
  %60 = vmatprep.subr.mxu0 0.0
  %61 = vmatpush1.msra.mxu0 %v31
  %62 = vmatprep.subr.mxu0 0.0
  %63 = vmatpush1.msra.mxu0 0.0
  %64 = vmatprep.subr.mxu0 0.0
  %65 = vmatpush1.msra.mxu0 0.0
  %66 = vmatprep.subr.mxu0 0.0
  %67 = vmatpush1.msra.mxu0 0.0
  %68 = vmatprep.subr.mxu0 0.0
  %69 = vmatpush1.msra.mxu0 0.0
  %70 = vmatprep.subr.mxu0 0.0
  %71 = vmatpush1.msra.mxu0 0.0
  %72 = vmatprep.subr.mxu0 0.0
  %73 = vmatpush1.msra.mxu0 0.0
  %74 = vmatprep.subr.mxu0 0.0
  %75 = vmatpush1.msra.mxu0 0.0
  %76 = vmatprep.subr.mxu0 0.0
  %77 = vmatpush1.msra.mxu0 0.0
  %78 = vmatprep.subr.mxu0 0.0
  %79 = vmatpush1.msra.mxu0 0.0
  %80 = vmatprep.subr.mxu0 0.0
  %81 = vmatpush1.msra.mxu0 0.0
  %82 = vmatprep.subr.mxu0 0.0
  %83 = vmatpush1.msra.mxu0 0.0
  %84 = vmatprep.subr.mxu0 0.0
  %85 = vmatpush1.msra.mxu0 0.0
  %86 = vmatprep.subr.mxu0 0.0
  %87 = vmatpush1.msra.mxu0 0.0
  %88 = vmatprep.subr.mxu0 0.0
  %89 = vmatpush1.msra.mxu0 0.0
  %90 = vmatprep.subr.mxu0 0.0
  %91 = vmatpush1.msra.mxu0 0.0
  %92 = vmatprep.subr.mxu0 0.0
  %93 = vmatpush1.msra.mxu0 0.0
  %94 = vmatprep.subr.mxu0 0.0
  %95 = vmatpush1.msra.mxu0 0.0
  %96 = vmatprep.subr.mxu0 0.0
  %97 = vmatpush1.msra.mxu0 0.0
  %98 = vmatprep.subr.mxu0 0.0
  %99 = vmatpush1.msra.mxu0 0.0
  %100 = vmatprep.subr.mxu0 0.0
  %101 = vmatpush1.msra.mxu0 0.0
  %102 = vmatprep.subr.mxu0 0.0
  %103 = vmatpush1.msra.mxu0 0.0
  %104 = vmatprep.subr.mxu0 0.0
  %105 = vmatpush1.msra.mxu0 0.0
  %106 = vmatprep.subr.mxu0 0.0
  %107 = vmatpush1.msra.mxu0 0.0
  %108 = vmatprep.subr.mxu0 0.0
  %109 = vmatpush1.msra.mxu0 0.0
  %110 = vmatprep.subr.mxu0 0.0
  %111 = vmatpush1.msra.mxu0 0.0
  %112 = vmatprep.mubr.f32.mxu0 0.0
  %113 = vmatmul.mubr.f32.gmra.mrb[0].mxu0 %v34
  %v114 = vpop.f32.mrb[0].mxu0
  %v115 = vadd.f32 0.0, %v114
  %v116 = vpop.f32.mrb[0].mxu0
  %117 = vmatprep.mubr.f32.mxu0 0.0
  %118 = vmatmul.mubr.f32.gmra.mrb[0].mxu0 %v37
  %v119 = vpop.f32.mrb[0].mxu0
  %v120 = vadd.f32 0.0, %v119
  %v121 = vpop.f32.mrb[0].mxu0
  %122 = vmatprep.mubr.f32.mxu0 0.0
  %123 = vmatmul.mubr.f32.gmra.mrb[0].mxu0 %v40
  %v124 = vpop.f32.mrb[0].mxu0
  %v125 = vadd.f32 0.0, %v124
  %v126 = vpop.f32.mrb[0].mxu0
  %127 = vmatprep.mubr.f32.mxu0 0.0
  %128 = vmatmul.mubr.f32.gmra.mrb[0].mxu0 %v43
  %v129 = vpop.f32.mrb[0].mxu0
  %v130 = vadd.f32 0.0, %v129
  %v131 = vpop.f32.mrb[0].mxu0
  %132 = vmatprep.mubr.f32.mxu0 0.0
  %133 = vmatmul.mubr.f32.gmra.mrb[0].mxu0 %v46
  %v134 = vpop.f32.mrb[0].mxu0
  %v135 = vadd.f32 0.0, %v134
  %v136 = vpop.f32.mrb[0].mxu0
  %137 = vdwg.mxu0
  %v138 = vld [vmem:[%s2] sm:$0xff]
  %v139 = vld [vmem:[%s3] sm:$0xff]
  %v140 = vld [vmem:[%s3 + $0x8] sm:$0xff]
  %v141 = vld [vmem:[%s3 + $0x10] sm:$0xff]
  %v142 = vld [vmem:[%s3 + $0x18] sm:$0xff]
  %v143 = vld [vmem:[%s3 + $0x20] sm:$0xff]
  %v144 = vld [vmem:[%s3 + $0x28] sm:$0xff]
  %v145 = vld [vmem:[%s3 + $0x30] sm:$0xff]
  %v146 = vld [vmem:[%s3 + $0x38] sm:$0xff]
  %v147 = vld [vmem:[%s3 + $0x40] sm:$0xff]
  %v148 = vld [vmem:[%s3 + $0x48] sm:$0xff]
  %v149 = vld [vmem:[%s3 + $0x50] sm:$0xff]
  %v150 = vld [vmem:[%s3 + $0x58] sm:$0xff]
  %v151 = vld [vmem:[%s3 + $0x60] sm:$0xff]
  %v152 = vld [vmem:[%s3 + $0x68] sm:$0xff]
  %v153 = vld [vmem:[%s3 + $0x70] sm:$0xff]
  %v154 = vld [vmem:[%s3 + $0x78] sm:$0xff]
  %vm155 = vcmask 261120
  %v157 = vsel %vm155, %v115, 0
  %159 = vmatprep.subr.mxu0 %v148
  %160 = vmatpush1.msra.mxu0 %v147
  %161 = vmatprep.subr.mxu0 %v150
  %162 = vmatpush1.msra.mxu0 %v149
  %163 = vmatprep.subr.mxu0 %v152
  %164 = vmatpush1.msra.mxu0 %v151
  %165 = vmatprep.subr.mxu0 %v154
  %166 = vmatpush1.msra.mxu0 %v153
  %167 = vmatprep.subr.mxu0 0.0
  %168 = vmatpush1.msra.mxu0 0.0
  %169 = vmatprep.subr.mxu0 0.0
  %170 = vmatpush1.msra.mxu0 0.0
  %171 = vmatprep.subr.mxu0 0.0
  %172 = vmatpush1.msra.mxu0 0.0
  %173 = vmatprep.subr.mxu0 0.0
  %174 = vmatpush1.msra.mxu0 0.0
  %175 = vmatprep.subr.mxu0 0.0
  %176 = vmatpush1.msra.mxu0 0.0
  %177 = vmatprep.subr.mxu0 0.0
  %178 = vmatpush1.msra.mxu0 0.0
  %179 = vmatprep.subr.mxu0 0.0
  %180 = vmatpush1.msra.mxu0 0.0
  %181 = vmatprep.subr.mxu0 0.0
  %182 = vmatpush1.msra.mxu0 0.0
  %183 = vmatprep.subr.mxu0 0.0
  %184 = vmatpush1.msra.mxu0 0.0
  %185 = vmatprep.subr.mxu0 0.0
  %186 = vmatpush1.msra.mxu0 0.0
  %187 = vmatprep.subr.mxu0 0.0
  %188 = vmatpush1.msra.mxu0 0.0
  %189 = vmatprep.subr.mxu0 0.0
  %190 = vmatpush1.msra.mxu0 0.0
  %191 = vmatprep.subr.mxu0 0.0
  %192 = vmatpush1.msra.mxu0 0.0
  %193 = vmatprep.subr.mxu0 0.0
  %194 = vmatpush1.msra.mxu0 0.0
  %195 = vmatprep.subr.mxu0 0.0
  %196 = vmatpush1.msra.mxu0 0.0
  %197 = vmatprep.subr.mxu0 0.0
  %198 = vmatpush1.msra.mxu0 0.0
  %199 = vmatprep.subr.mxu0 0.0
  %200 = vmatpush1.msra.mxu0 0.0
  %201 = vmatprep.subr.mxu0 0.0
  %202 = vmatpush1.msra.mxu0 0.0
  %203 = vmatprep.subr.mxu0 0.0
  %204 = vmatpush1.msra.mxu0 0.0
  %205 = vmatprep.subr.mxu0 0.0
  %206 = vmatpush1.msra.mxu0 0.0
  %207 = vmatprep.subr.mxu0 0.0
  %208 = vmatpush1.msra.mxu0 0.0
  %209 = vmatprep.subr.mxu0 0.0
  %210 = vmatpush1.msra.mxu0 0.0
  %211 = vmatprep.subr.mxu0 0.0
  %212 = vmatpush1.msra.mxu0 0.0
  %213 = vmatprep.subr.mxu0 0.0
  %214 = vmatpush1.msra.mxu0 0.0
  %215 = vmatprep.subr.mxu0 0.0
  %216 = vmatpush1.msra.mxu0 0.0
  %217 = vmatprep.subr.mxu0 0.0
  %218 = vmatpush1.msra.mxu0 0.0
  %219 = vmatprep.subr.mxu0 0.0
  %220 = vmatpush1.msra.mxu0 0.0
  %221 = vmatprep.subr.mxu0 0.0
  %222 = vmatpush1.msra.mxu0 0.0
  %223 = vmatprep.mubr.f32.mxu0 0.0
  %224 = vmatmul.mubr.f32.gmra.mrb[0].mxu0 %v157
  %v225 = vpop.f32.mrb[0].mxu0
  %v226 = vadd.f32 0.0, %v225
  %v227 = vpop.f32.mrb[0].mxu0
  %v228 = vadd.f32 0.0, %v227
  %229 = vdwg.mxu0
  %v231 = vsel %vm155, %v138, 0
  %233 = vmatprep.subr.mxu0 %v140
  %234 = vmatpush1.msra.mxu0 %v139
  %235 = vmatprep.subr.mxu0 %v142
  %236 = vmatpush1.msra.mxu0 %v141
  %237 = vmatprep.subr.mxu0 %v144
  %238 = vmatpush1.msra.mxu0 %v143
  %239 = vmatprep.subr.mxu0 %v146
  %240 = vmatpush1.msra.mxu0 %v145
  %241 = vmatprep.subr.mxu0 0.0
  %242 = vmatpush1.msra.mxu0 0.0
  %243 = vmatprep.subr.mxu0 0.0
  %244 = vmatpush1.msra.mxu0 0.0
  %245 = vmatprep.subr.mxu0 0.0
  %246 = vmatpush1.msra.mxu0 0.0
  %247 = vmatprep.subr.mxu0 0.0
  %248 = vmatpush1.msra.mxu0 0.0
  %249 = vmatprep.subr.mxu0 0.0
  %250 = vmatpush1.msra.mxu0 0.0
  %251 = vmatprep.subr.mxu0 0.0
  %252 = vmatpush1.msra.mxu0 0.0
  %253 = vmatprep.subr.mxu0 0.0
  %254 = vmatpush1.msra.mxu0 0.0
  %255 = vmatprep.subr.mxu0 0.0
  %256 = vmatpush1.msra.mxu0 0.0
  %257 = vmatprep.subr.mxu0 0.0
  %258 = vmatpush1.msra.mxu0 0.0
  %259 = vmatprep.subr.mxu0 0.0
  %260 = vmatpush1.msra.mxu0 0.0
  %261 = vmatprep.subr.mxu0 0.0
  %262 = vmatpush1.msra.mxu0 0.0
  %263 = vmatprep.subr.mxu0 0.0
  %264 = vmatpush1.msra.mxu0 0.0
  %265 = vmatprep.subr.mxu0 0.0
  %266 = vmatpush1.msra.mxu0 0.0
  %267 = vmatprep.subr.mxu0 0.0
  %268 = vmatpush1.msra.mxu0 0.0
  %269 = vmatprep.subr.mxu0 0.0
  %270 = vmatpush1.msra.mxu0 0.0
  %271 = vmatprep.subr.mxu0 0.0
  %272 = vmatpush1.msra.mxu0 0.0
  %273 = vmatprep.subr.mxu0 0.0
  %274 = vmatpush1.msra.mxu0 0.0
  %275 = vmatprep.subr.mxu0 0.0
  %276 = vmatpush1.msra.mxu0 0.0
  %277 = vmatprep.subr.mxu0 0.0
  %278 = vmatpush1.msra.mxu0 0.0
  %279 = vmatprep.subr.mxu0 0.0
  %280 = vmatpush1.msra.mxu0 0.0
  %281 = vmatprep.subr.mxu0 0.0
  %282 = vmatpush1.msra.mxu0 0.0
  %283 = vmatprep.subr.mxu0 0.0
  %284 = vmatpush1.msra.mxu0 0.0
  %285 = vmatprep.subr.mxu0 0.0
  %286 = vmatpush1.msra.mxu0 0.0
  %287 = vmatprep.subr.mxu0 0.0
  %288 = vmatpush1.msra.mxu0 0.0
  %289 = vmatprep.subr.mxu0 0.0
  %290 = vmatpush1.msra.mxu0 0.0
  %291 = vmatprep.subr.mxu0 0.0
  %292 = vmatpush1.msra.mxu0 0.0
  %293 = vmatprep.subr.mxu0 0.0
  %294 = vmatpush1.msra.mxu0 0.0
  %295 = vmatprep.subr.mxu0 0.0
  %296 = vmatpush1.msra.mxu0 0.0
  %297 = vmatprep.mubr.f32.mxu0 0.0
  %298 = vmatmul.mubr.f32.gmra.mrb[0].mxu0 %v231
  %v299 = vpop.f32.mrb[0].mxu0
  %v300 = vadd.f32 %v226, %v299
  %v301 = vpop.f32.mrb[0].mxu0
  %v302 = vadd.f32 %v228, %v301
  %303 = vdwg.mxu0
  %v304 = vld [vmem:[%s3 + $0x80] sm:$0xff]
  %v305 = vld [vmem:[%s3 + $0x88] sm:$0xff]
  %v306 = vld [vmem:[%s3 + $0x90] sm:$0xff]
  %v307 = vld [vmem:[%s3 + $0x98] sm:$0xff]
  %v308 = vld [vmem:[%s3 + $0xa0] sm:$0xff]
  %v309 = vld [vmem:[%s3 + $0xa8] sm:$0xff]
  %v310 = vld [vmem:[%s3 + $0xb0] sm:$0xff]
  %v311 = vld [vmem:[%s3 + $0xb8] sm:$0xff]
  %v313 = vsel %vm155, %v120, 0
  %315 = vmatprep.subr.mxu0 %v305
  %316 = vmatpush1.msra.mxu0 %v304
  %317 = vmatprep.subr.mxu0 %v307
  %318 = vmatpush1.msra.mxu0 %v306
  %319 = vmatprep.subr.mxu0 %v309
  %320 = vmatpush1.msra.mxu0 %v308
  %321 = vmatprep.subr.mxu0 %v311
  %322 = vmatpush1.msra.mxu0 %v310
  %323 = vmatprep.subr.mxu0 0.0
  %324 = vmatpush1.msra.mxu0 0.0
  %325 = vmatprep.subr.mxu0 0.0
  %326 = vmatpush1.msra.mxu0 0.0
  %327 = vmatprep.subr.mxu0 0.0
  %328 = vmatpush1.msra.mxu0 0.0
  %329 = vmatprep.subr.mxu0 0.0
  %330 = vmatpush1.msra.mxu0 0.0
  %331 = vmatprep.subr.mxu0 0.0
  %332 = vmatpush1.msra.mxu0 0.0
  %333 = vmatprep.subr.mxu0 0.0
  %334 = vmatpush1.msra.mxu0 0.0
  %335 = vmatprep.subr.mxu0 0.0
  %336 = vmatpush1.msra.mxu0 0.0
  %337 = vmatprep.subr.mxu0 0.0
  %338 = vmatpush1.msra.mxu0 0.0
  %339 = vmatprep.subr.mxu0 0.0
  %340 = vmatpush1.msra.mxu0 0.0
  %341 = vmatprep.subr.mxu0 0.0
  %342 = vmatpush1.msra.mxu0 0.0
  %343 = vmatprep.subr.mxu0 0.0
  %344 = vmatpush1.msra.mxu0 0.0
  %345 = vmatprep.subr.mxu0 0.0
  %346 = vmatpush1.msra.mxu0 0.0
  %347 = vmatprep.subr.mxu0 0.0
  %348 = vmatpush1.msra.mxu0 0.0
  %349 = vmatprep.subr.mxu0 0.0
  %350 = vmatpush1.msra.mxu0 0.0
  %351 = vmatprep.subr.mxu0 0.0
  %352 = vmatpush1.msra.mxu0 0.0
  %353 = vmatprep.subr.mxu0 0.0
  %354 = vmatpush1.msra.mxu0 0.0
  %355 = vmatprep.subr.mxu0 0.0
  %356 = vmatpush1.msra.mxu0 0.0
  %357 = vmatprep.subr.mxu0 0.0
  %358 = vmatpush1.msra.mxu0 0.0
  %359 = vmatprep.subr.mxu0 0.0
  %360 = vmatpush1.msra.mxu0 0.0
  %361 = vmatprep.subr.mxu0 0.0
  %362 = vmatpush1.msra.mxu0 0.0
  %363 = vmatprep.subr.mxu0 0.0
  %364 = vmatpush1.msra.mxu0 0.0
  %365 = vmatprep.subr.mxu0 0.0
  %366 = vmatpush1.msra.mxu0 0.0
  %367 = vmatprep.subr.mxu0 0.0
  %368 = vmatpush1.msra.mxu0 0.0
  %369 = vmatprep.subr.mxu0 0.0
  %370 = vmatpush1.msra.mxu0 0.0
  %371 = vmatprep.subr.mxu0 0.0
  %372 = vmatpush1.msra.mxu0 0.0
  %373 = vmatprep.subr.mxu0 0.0
  %374 = vmatpush1.msra.mxu0 0.0
  %375 = vmatprep.subr.mxu0 0.0
  %376 = vmatpush1.msra.mxu0 0.0
  %377 = vmatprep.subr.mxu0 0.0
  %378 = vmatpush1.msra.mxu0 0.0
  %379 = vmatprep.mubr.f32.mxu0 0.0
  %380 = vmatmul.mubr.f32.gmra.mrb[0].mxu0 %v313
  %v381 = vpop.f32.mrb[0].mxu0
  %v382 = vadd.f32 0.0, %v381
  %v383 = vpop.f32.mrb[0].mxu0
  %v384 = vadd.f32 0.0, %v383
  %385 = vdwg.mxu0
  %v386 = vadd.f32 %v300, %v382
  %v387 = vadd.f32 %v302, %v384
  %v388 = vld [vmem:[%s3 + $0xc0] sm:$0xff]
  %v389 = vld [vmem:[%s3 + $0xc8] sm:$0xff]
  %v390 = vld [vmem:[%s3 + $0xd0] sm:$0xff]
  %v391 = vld [vmem:[%s3 + $0xd8] sm:$0xff]
  %v392 = vld [vmem:[%s3 + $0xe0] sm:$0xff]
  %v393 = vld [vmem:[%s3 + $0xe8] sm:$0xff]
  %v394 = vld [vmem:[%s3 + $0xf0] sm:$0xff]
  %v395 = vld [vmem:[%s3 + $0xf8] sm:$0xff]
  %v397 = vsel %vm155, %v125, 0
  %399 = vmatprep.subr.mxu0 %v389
  %400 = vmatpush1.msra.mxu0 %v388
  %401 = vmatprep.subr.mxu0 %v391
  %402 = vmatpush1.msra.mxu0 %v390
  %403 = vmatprep.subr.mxu0 %v393
  %404 = vmatpush1.msra.mxu0 %v392
  %405 = vmatprep.subr.mxu0 %v395
  %406 = vmatpush1.msra.mxu0 %v394
  %407 = vmatprep.subr.mxu0 0.0
  %408 = vmatpush1.msra.mxu0 0.0
  %409 = vmatprep.subr.mxu0 0.0
  %410 = vmatpush1.msra.mxu0 0.0
  %411 = vmatprep.subr.mxu0 0.0
  %412 = vmatpush1.msra.mxu0 0.0
  %413 = vmatprep.subr.mxu0 0.0
  %414 = vmatpush1.msra.mxu0 0.0
  %415 = vmatprep.subr.mxu0 0.0
  %416 = vmatpush1.msra.mxu0 0.0
  %417 = vmatprep.subr.mxu0 0.0
  %418 = vmatpush1.msra.mxu0 0.0
  %419 = vmatprep.subr.mxu0 0.0
  %420 = vmatpush1.msra.mxu0 0.0
  %421 = vmatprep.subr.mxu0 0.0
  %422 = vmatpush1.msra.mxu0 0.0
  %423 = vmatprep.subr.mxu0 0.0
  %424 = vmatpush1.msra.mxu0 0.0
  %425 = vmatprep.subr.mxu0 0.0
  %426 = vmatpush1.msra.mxu0 0.0
  %427 = vmatprep.subr.mxu0 0.0
  %428 = vmatpush1.msra.mxu0 0.0
  %429 = vmatprep.subr.mxu0 0.0
  %430 = vmatpush1.msra.mxu0 0.0
  %431 = vmatprep.subr.mxu0 0.0
  %432 = vmatpush1.msra.mxu0 0.0
  %433 = vmatprep.subr.mxu0 0.0
  %434 = vmatpush1.msra.mxu0 0.0
  %435 = vmatprep.subr.mxu0 0.0
  %436 = vmatpush1.msra.mxu0 0.0
  %437 = vmatprep.subr.mxu0 0.0
  %438 = vmatpush1.msra.mxu0 0.0
  %439 = vmatprep.subr.mxu0 0.0
  %440 = vmatpush1.msra.mxu0 0.0
  %441 = vmatprep.subr.mxu0 0.0
  %442 = vmatpush1.msra.mxu0 0.0
  %443 = vmatprep.subr.mxu0 0.0
  %444 = vmatpush1.msra.mxu0 0.0
  %445 = vmatprep.subr.mxu0 0.0
  %446 = vmatpush1.msra.mxu0 0.0
  %447 = vmatprep.subr.mxu0 0.0
  %448 = vmatpush1.msra.mxu0 0.0
  %449 = vmatprep.subr.mxu0 0.0
  %450 = vmatpush1.msra.mxu0 0.0
  %451 = vmatprep.subr.mxu0 0.0
  %452 = vmatpush1.msra.mxu0 0.0
  %453 = vmatprep.subr.mxu0 0.0
  %454 = vmatpush1.msra.mxu0 0.0
  %455 = vmatprep.subr.mxu0 0.0
  %456 = vmatpush1.msra.mxu0 0.0
  %457 = vmatprep.subr.mxu0 0.0
  %458 = vmatpush1.msra.mxu0 0.0
  %459 = vmatprep.subr.mxu0 0.0
  %460 = vmatpush1.msra.mxu0 0.0
  %461 = vmatprep.subr.mxu0 0.0
  %462 = vmatpush1.msra.mxu0 0.0
  %463 = vmatprep.mubr.f32.mxu0 0.0
  %464 = vmatmul.mubr.f32.gmra.mrb[0].mxu0 %v397
  %v465 = vpop.f32.mrb[0].mxu0
  %v466 = vadd.f32 0.0, %v465
  %v467 = vpop.f32.mrb[0].mxu0
  %v468 = vadd.f32 0.0, %v467
  %469 = vdwg.mxu0
  %v470 = vadd.f32 %v386, %v466
  %v471 = vadd.f32 %v387, %v468
  %v472 = vld [vmem:[%s3 + $0x100] sm:$0xff]
  %v473 = vld [vmem:[%s3 + $0x108] sm:$0xff]
  %v474 = vld [vmem:[%s3 + $0x110] sm:$0xff]
  %v475 = vld [vmem:[%s3 + $0x118] sm:$0xff]
  %v476 = vld [vmem:[%s3 + $0x120] sm:$0xff]
  %v477 = vld [vmem:[%s3 + $0x128] sm:$0xff]
  %v478 = vld [vmem:[%s3 + $0x130] sm:$0xff]
  %v479 = vld [vmem:[%s3 + $0x138] sm:$0xff]
  %v481 = vsel %vm155, %v130, 0
  %483 = vmatprep.subr.mxu0 %v473
  %484 = vmatpush1.msra.mxu0 %v472
  %485 = vmatprep.subr.mxu0 %v475
  %486 = vmatpush1.msra.mxu0 %v474
  %487 = vmatprep.subr.mxu0 %v477
  %488 = vmatpush1.msra.mxu0 %v476
  %489 = vmatprep.subr.mxu0 %v479
  %490 = vmatpush1.msra.mxu0 %v478
  %491 = vmatprep.subr.mxu0 0.0
  %492 = vmatpush1.msra.mxu0 0.0
  %493 = vmatprep.subr.mxu0 0.0
  %494 = vmatpush1.msra.mxu0 0.0
  %495 = vmatprep.subr.mxu0 0.0
  %496 = vmatpush1.msra.mxu0 0.0
  %497 = vmatprep.subr.mxu0 0.0
  %498 = vmatpush1.msra.mxu0 0.0
  %499 = vmatprep.subr.mxu0 0.0
  %500 = vmatpush1.msra.mxu0 0.0
  %501 = vmatprep.subr.mxu0 0.0
  %502 = vmatpush1.msra.mxu0 0.0
  %503 = vmatprep.subr.mxu0 0.0
  %504 = vmatpush1.msra.mxu0 0.0
  %505 = vmatprep.subr.mxu0 0.0
  %506 = vmatpush1.msra.mxu0 0.0
  %507 = vmatprep.subr.mxu0 0.0
  %508 = vmatpush1.msra.mxu0 0.0
  %509 = vmatprep.subr.mxu0 0.0
  %510 = vmatpush1.msra.mxu0 0.0
  %511 = vmatprep.subr.mxu0 0.0
  %512 = vmatpush1.msra.mxu0 0.0
  %513 = vmatprep.subr.mxu0 0.0
  %514 = vmatpush1.msra.mxu0 0.0
  %515 = vmatprep.subr.mxu0 0.0
  %516 = vmatpush1.msra.mxu0 0.0
  %517 = vmatprep.subr.mxu0 0.0
  %518 = vmatpush1.msra.mxu0 0.0
  %519 = vmatprep.subr.mxu0 0.0
  %520 = vmatpush1.msra.mxu0 0.0
  %521 = vmatprep.subr.mxu0 0.0
  %522 = vmatpush1.msra.mxu0 0.0
  %523 = vmatprep.subr.mxu0 0.0
  %524 = vmatpush1.msra.mxu0 0.0
  %525 = vmatprep.subr.mxu0 0.0
  %526 = vmatpush1.msra.mxu0 0.0
  %527 = vmatprep.subr.mxu0 0.0
  %528 = vmatpush1.msra.mxu0 0.0
  %529 = vmatprep.subr.mxu0 0.0
  %530 = vmatpush1.msra.mxu0 0.0
  %531 = vmatprep.subr.mxu0 0.0
  %532 = vmatpush1.msra.mxu0 0.0
  %533 = vmatprep.subr.mxu0 0.0
  %534 = vmatpush1.msra.mxu0 0.0
  %535 = vmatprep.subr.mxu0 0.0
  %536 = vmatpush1.msra.mxu0 0.0
  %537 = vmatprep.subr.mxu0 0.0
  %538 = vmatpush1.msra.mxu0 0.0
  %539 = vmatprep.subr.mxu0 0.0
  %540 = vmatpush1.msra.mxu0 0.0
  %541 = vmatprep.subr.mxu0 0.0
  %542 = vmatpush1.msra.mxu0 0.0
  %543 = vmatprep.subr.mxu0 0.0
  %544 = vmatpush1.msra.mxu0 0.0
  %545 = vmatprep.subr.mxu0 0.0
  %546 = vmatpush1.msra.mxu0 0.0
  %547 = vmatprep.mubr.f32.mxu0 0.0
  %548 = vmatmul.mubr.f32.gmra.mrb[0].mxu0 %v481
  %v549 = vpop.f32.mrb[0].mxu0
  %v550 = vadd.f32 0.0, %v549
  %v551 = vpop.f32.mrb[0].mxu0
  %v552 = vadd.f32 0.0, %v551
  %553 = vdwg.mxu0
  %v554 = vadd.f32 %v470, %v550
  %v555 = vadd.f32 %v471, %v552
  %v556 = vld [vmem:[%s3 + $0x140] sm:$0xff]
  %v557 = vld [vmem:[%s3 + $0x148] sm:$0xff]
  %v558 = vld [vmem:[%s3 + $0x150] sm:$0xff]
  %v559 = vld [vmem:[%s3 + $0x158] sm:$0xff]
  %v560 = vld [vmem:[%s3 + $0x160] sm:$0xff]
  %v561 = vld [vmem:[%s3 + $0x168] sm:$0xff]
  %v562 = vld [vmem:[%s3 + $0x170] sm:$0xff]
  %v563 = vld [vmem:[%s3 + $0x178] sm:$0xff]
  %v565 = vsel %vm155, %v135, 0
  %567 = vmatprep.subr.mxu0 %v557
  %568 = vmatpush1.msra.mxu0 %v556
  %569 = vmatprep.subr.mxu0 %v559
  %570 = vmatpush1.msra.mxu0 %v558
  %571 = vmatprep.subr.mxu0 %v561
  %572 = vmatpush1.msra.mxu0 %v560
  %573 = vmatprep.subr.mxu0 %v563
  %574 = vmatpush1.msra.mxu0 %v562
  %575 = vmatprep.subr.mxu0 0.0
  %576 = vmatpush1.msra.mxu0 0.0
  %577 = vmatprep.subr.mxu0 0.0
  %578 = vmatpush1.msra.mxu0 0.0
  %579 = vmatprep.subr.mxu0 0.0
  %580 = vmatpush1.msra.mxu0 0.0
  %581 = vmatprep.subr.mxu0 0.0
  %582 = vmatpush1.msra.mxu0 0.0
  %583 = vmatprep.subr.mxu0 0.0
  %584 = vmatpush1.msra.mxu0 0.0
  %585 = vmatprep.subr.mxu0 0.0
  %586 = vmatpush1.msra.mxu0 0.0
  %587 = vmatprep.subr.mxu0 0.0
  %588 = vmatpush1.msra.mxu0 0.0
  %589 = vmatprep.subr.mxu0 0.0
  %590 = vmatpush1.msra.mxu0 0.0
  %591 = vmatprep.subr.mxu0 0.0
  %592 = vmatpush1.msra.mxu0 0.0
  %593 = vmatprep.subr.mxu0 0.0
  %594 = vmatpush1.msra.mxu0 0.0
  %595 = vmatprep.subr.mxu0 0.0
  %596 = vmatpush1.msra.mxu0 0.0
  %597 = vmatprep.subr.mxu0 0.0
  %598 = vmatpush1.msra.mxu0 0.0
  %599 = vmatprep.subr.mxu0 0.0
  %600 = vmatpush1.msra.mxu0 0.0
  %601 = vmatprep.subr.mxu0 0.0
  %602 = vmatpush1.msra.mxu0 0.0
  %603 = vmatprep.subr.mxu0 0.0
  %604 = vmatpush1.msra.mxu0 0.0
  %605 = vmatprep.subr.mxu0 0.0
  %606 = vmatpush1.msra.mxu0 0.0
  %607 = vmatprep.subr.mxu0 0.0
  %608 = vmatpush1.msra.mxu0 0.0
  %609 = vmatprep.subr.mxu0 0.0
  %610 = vmatpush1.msra.mxu0 0.0
  %611 = vmatprep.subr.mxu0 0.0
  %612 = vmatpush1.msra.mxu0 0.0
  %613 = vmatprep.subr.mxu0 0.0
  %614 = vmatpush1.msra.mxu0 0.0
  %615 = vmatprep.subr.mxu0 0.0
  %616 = vmatpush1.msra.mxu0 0.0
  %617 = vmatprep.subr.mxu0 0.0
  %618 = vmatpush1.msra.mxu0 0.0
  %619 = vmatprep.subr.mxu0 0.0
  %620 = vmatpush1.msra.mxu0 0.0
  %621 = vmatprep.subr.mxu0 0.0
  %622 = vmatpush1.msra.mxu0 0.0
  %623 = vmatprep.subr.mxu0 0.0
  %624 = vmatpush1.msra.mxu0 0.0
  %625 = vmatprep.subr.mxu0 0.0
  %626 = vmatpush1.msra.mxu0 0.0
  %627 = vmatprep.subr.mxu0 0.0
  %628 = vmatpush1.msra.mxu0 0.0
  %629 = vmatprep.subr.mxu0 0.0
  %630 = vmatpush1.msra.mxu0 0.0
  %631 = vmatprep.mubr.f32.mxu0 0.0
  %632 = vmatmul.mubr.f32.gmra.mrb[0].mxu0 %v565
  %v633 = vpop.f32.mrb[0].mxu0
  %v634 = vadd.f32 0.0, %v633
  %v635 = vpop.f32.mrb[0].mxu0
  %v636 = vadd.f32 0.0, %v635
  %637 = vdwg.mxu0
  %v638 = vadd.f32 %v554, %v634
  %v639 = vadd.f32 %v555, %v636
  %v640 = vld [vmem:[%s4] sm:$0x3]
  %v642 = vlaneseq
  %v643 = vshrl.u32 %v642, 7
  %v644 = vsub.s32 0, %v643
  %v645 = vrot.slane %v640, %v644
  %v646 = vlaneseq
  %v647 = vshrl.u32 %v646, 7
  %v648 = vsub.s32 1, %v647
  %v649 = vrot.slane %v640, %v648
  %v652 = vadd.f32 %v638, %v645
  %v653 = vadd.f32 %v639, %v649
  %v654 = vmax.f32 %v652, 0.0
  %655 = vst [vmem:[%s5] sm:$0xff] %v654
  %656 = vst [vmem:[%s5 + $0x8] sm:$0xff] %v653
  // Predicated region
  $region22: #{_device_forward.1} parent=0 // pred_check
    _
  $region23: #{_device_forward.1} parent=0 // pred_check_branch
    %658 = sbr.rel (0) target = $region25
  $region24: #{_device_forward.1} parent=0 // pred_region
    _
  $region25: #{_device_forward.1} parent=0 // pred_fallthru
    _
  // Predicated region
  $region26: #{_device_forward.1} parent=0 // pred_check
    _
  $region27: #{_device_forward.1} parent=0 // pred_check_branch
    %660 = sbr.rel (0) target = $region29
  $region28: #{_device_forward.1} parent=0 // pred_region
    _
  $region29: #{_device_forward.1} parent=0 // pred_fallthru
    _

</llo_original>
